<compile_context>
chip_gen: v6e
topology: v6e:2x2x1
jax: 0.10.0
libtpu: 0.0.40
codegen_flags: <defaults>
</compile_context>

<pallas_src>
import functools
import math

import jax
import jax.numpy as jnp
from jax.experimental import pallas as pl
from jax.experimental.pallas import tpu as pltpu


_SMALL_FALLBACK_BYTES = 1 * 1024 * 1024   # below this, plain jnp (fusible by XLA)
_MEGACORE_SPLIT_BYTES = 8 * 1024 * 1024   # above this, force >=_MIN_BATCH_BLOCKS
_MIN_BATCH_BLOCKS = 4


def _round_up(a, b):
    return ((a + b - 1) // b) * b


@functools.lru_cache(maxsize=1)
def _vmem_budget():
    """(tile_target_bytes, vmem_limit_bytes) gated per TPU generation."""
    try:
        cap = int(getattr(pltpu.get_tpu_info(), "vmem_capacity_bytes", 0))
    except Exception:  # no device / API mismatch -> conservative default
        cap = 0
    if cap >= 96 * 1024 * 1024:
        # v5e / v6e: 128 MiB physical VMEM. Double-buffered x+out = 4*12 MiB
        # = 48 MiB, comfortably under a 64 MiB scoped limit.
        return 12 * 1024 * 1024, 64 * 1024 * 1024
    # v7x (64 MiB per TensorCore) or unknown: 4*8 MiB = 32 MiB < 44 MiB.
    return 8 * 1024 * 1024, 44 * 1024 * 1024


def _scale_kernel(x_ref, w_ref, o_ref, *, wmin, wmax):
    # Clamp the f32 weight row (mirrors torch.clamp on the f32 parameter),
    # THEN cast to the activation dtype, then broadcast-multiply.
    w = jnp.clip(w_ref[...], wmin, wmax).astype(o_ref.dtype)   # (1, tf)
    o_ref[...] = x_ref[...] * w                                # (tb, tf)


def _jnp_forward(x2, weights_f32, wmin, wmax):
    w = jnp.clip(weights_f32, wmin, wmax).astype(x2.dtype)
    return x2 * w[None, :]


def _forward_2d(x2, weights_f32, wmin, wmax, min_pallas_bytes):
    B, F = x2.shape
    itemsize = jnp.dtype(x2.dtype).itemsize

    # Tiny problems: let XLA fuse the multiply instead of paying a dedicated
    # custom-call HBM round trip.
    if B * F * itemsize < min_pallas_bytes:
        return _jnp_forward(x2, weights_f32, wmin, wmax)

    # ---- lane-dense packing: fold k rows into one so the lane dim is a
    # multiple of 128 (unmasked vst). Pure reshape on x; weights are tiled. ----
    k = 1
    if F % 128 != 0:
        kk = 128 // math.gcd(F, 128)
        if kk > 1:
            if B % kk == 0:
                k = kk
            elif B > kk:
                # Body + tail split: keep >99% of rows on the unmasked path,
                # handle the < kk leftover rows with plain jnp.
                b_body = (B // kk) * kk
                body = _forward_2d(x2[:b_body], weights_f32, wmin, wmax,
                                   min_pallas_bytes)
                tail = _jnp_forward(x2[b_body:], weights_f32, wmin, wmax)
                return jnp.concatenate([body, tail], axis=0)
            # else: B <= kk -> tiny; fall through (full-dim block, masked ok).

    Bp, Fp = B // k, F * k
    x_packed = x2.reshape(Bp, Fp)
    w_row = weights_f32 if k == 1 else jnp.tile(weights_f32, k)
    w_packed = w_row.reshape(1, Fp)                 # stays f32 for the clamp

    # ---- tile selection ----
    sublane = max(8, 32 // itemsize)                # 8 f32, 16 bf16, 32 int8
    tile_target, vmem_limit = _vmem_budget()

    # Feature tile: whole feature dim unless one sublane-row of it already
    # blows the per-buffer budget; then tile lanes in multiples of 128.
    max_tf_elems = tile_target // (sublane * itemsize)
    if Fp <= max_tf_elems:
        tf = Fp
    else:
        tf = max((max_tf_elems // 128) * 128, 128)

    # Batch tile: fill the per-buffer budget, rounded to the dtype sublane tile.
    tb = max((tile_target // (tf * itemsize)) // sublane * sublane, sublane)

    # Non-trivial problems: guarantee >= _MIN_BATCH_BLOCKS batch blocks so the
    # grid never collapses to (1,1) (v7x megacore sharding + DMA overlap).
    if Bp * Fp * itemsize > _MEGACORE_SPLIT_BYTES:
        tb_cap = max(_round_up(pl.cdiv(Bp, _MIN_BATCH_BLOCKS), sublane), sublane)
        tb = min(tb, tb_cap)
    tb = min(tb, Bp)                                # full sublane dim is legal

    nf = pl.cdiv(Fp, tf)
    nb = pl.cdiv(Bp, tb)

    cost = pl.CostEstimate(
        flops=Bp * Fp,
        transcendentals=0,
        bytes_accessed=2 * Bp * Fp * itemsize + Fp * 4,
    )

    out = pl.pallas_call(
        functools.partial(_scale_kernel, wmin=wmin, wmax=wmax),
        out_shape=jax.ShapeDtypeStruct((Bp, Fp), x2.dtype),
        grid_spec=pltpu.PrefetchScalarGridSpec(
            num_scalar_prefetch=0,
            # Feature axis OUTER: the weight block index is constant across
            # the inner batch sweep, so it is loaded once per feature block.
            grid=(nf, nb),
            in_specs=[
                pl.BlockSpec((tb, tf), lambda f, b: (b, f)),   # activations
                pl.BlockSpec((1, tf), lambda f, b: (0, f)),    # f32 weights
            ],
            out_specs=pl.BlockSpec((tb, tf), lambda f, b: (b, f)),
        ),
        compiler_params=pltpu.CompilerParams(
            dimension_semantics=("parallel", "parallel"),
            vmem_limit_bytes=vmem_limit,
        ),
        cost_estimate=cost,
    )(x_packed, w_packed)

    return out.reshape(B, F)


def my_linear_layer_forward(x, weights, weight_range, *,
                            min_pallas_bytes=_SMALL_FALLBACK_BYTES):
    """Pallas equivalent of the diagonal linear layer forward.

    x:        (..., F) float array
    weights:  (F,) per-feature diagonal weights (clamped in f32)
    weight_range: (wmin, wmax) clamp range
    """
    wmin, wmax = float(weight_range[0]), float(weight_range[1])
    if wmin > wmax:
        raise Exception("weight range is wrong!!!")

    orig_shape = x.shape
    F = orig_shape[-1]
    assert weights.shape == (F,)

    B = 1
    for d in orig_shape[:-1]:
        B *= d
    x2 = x.reshape(B, F)
    weights_f32 = weights.astype(jnp.float32)

    out = _forward_2d(x2, weights_f32, wmin, wmax, min_pallas_bytes)
    return out.reshape(orig_shape)


def init_my_linear_layer(in_features, out_features, weight_range):
    """Deterministic parameter init mirroring the PyTorch __init__."""
    if weight_range[0] > weight_range[1]:
        raise Exception("weight range is wrong!!!")
    mid = (weight_range[0] + weight_range[1]) / 2.0
    weights = jnp.full((in_features,), mid, dtype=jnp.float32)
    bias = jnp.zeros((out_features,), dtype=jnp.float32)  # unused in forward
    return weights, bias


if __name__ == "__main__":
    key = jax.random.PRNGKey(0)
    k0, k1, k2, k3 = jax.random.split(key, 4)
    weight_range = (0.1, 0.9)

    def ref_fn(x, w):
        wc = jnp.clip(w.astype(jnp.float32), weight_range[0], weight_range[1])
        return x * wc.astype(x.dtype)[None, :]

    # 1) packed lane-dense path (F=32 folds 4 rows -> 128 lanes), forced Pallas.
    F1, B1 = 32, 16
    w1, _bias = init_my_linear_layer(F1, F1, weight_range)
    w1 = w1 + 0.5 * jax.random.normal(k1, w1.shape, dtype=jnp.float32)
    x1 = jax.random.normal(k0, (B1, F1), dtype=jnp.float32)
    out1 = jax.block_until_ready(
        my_linear_layer_forward(x1, w1, weight_range, min_pallas_bytes=0))
    assert out1.shape == x1.shape
    assert jnp.allclose(out1, ref_fn(x1, w1), atol=1e-6, rtol=1e-6), \
        "mismatch vs reference (packed path)"

    # 2) body + tail split (F=48 -> kk=8, B=10 not divisible), forced Pallas.
    x2_ = jax.random.normal(k2, (10, 48), dtype=jnp.float32)
    w2 = jax.random.normal(k3, (48,), dtype=jnp.float32)
    out2 = jax.block_until_ready(
        my_linear_layer_forward(x2_, w2, weight_range, min_pallas_bytes=0))
    assert jnp.allclose(out2, ref_fn(x2_, w2), atol=1e-6, rtol=1e-6), \
        "mismatch vs reference (body+tail split)"

    # 3) bf16 activations: f32 clamp-then-cast semantics, sublane tile = 16.
    x3 = jax.random.normal(k0, (32, 256), dtype=jnp.bfloat16)
    w3 = jax.random.normal(k1, (256,), dtype=jnp.float32)
    out3 = jax.block_until_ready(
        my_linear_layer_forward(x3, w3, weight_range, min_pallas_bytes=0))
    assert jnp.allclose(out3.astype(jnp.float32),
                        ref_fn(x3, w3).astype(jnp.float32),
                        atol=1e-2, rtol=1e-2), "mismatch vs reference (bf16)"

    # 4) tiny-problem default threshold: skips Pallas (fusible jnp path).
    out4 = jax.block_until_ready(my_linear_layer_forward(x1, w1, weight_range))
    assert jnp.allclose(out4, ref_fn(x1, w1), atol=1e-6, rtol=1e-6), \
        "mismatch vs reference (small-problem fallback)"

    print("KERNEL_OK")
</pallas_src>

<mosaic_0001>
module attributes {stable_mosaic.version = 11 : i64} {
  func.func @_scale_kernel(%arg0: i32, %arg1: i32, %arg2: memref<4x128xf32, #tpu.memory_space<vmem>>, %arg3: memref<1x128xf32, #tpu.memory_space<vmem>>, %arg4: memref<4x128xf32, #tpu.memory_space<vmem>>) attributes {dimension_semantics = [#tpu.dimension_semantics<parallel>, #tpu.dimension_semantics<parallel>], iteration_bounds = array<i64: 1, 1>, scalar_prefetch = 0 : i64, scratch_operands = 0 : i64, tpu.core_type = #tpu.core_type<tc>, window_params = [{transform_indices = @transform_0, window_bounds = array<i64: 4, 128>}, {transform_indices = @transform_1, window_bounds = array<i64: 1, 128>}, {transform_indices = @transform_2, window_bounds = array<i64: 4, 128>}]} {
    %c0 = arith.constant 0 : index
    %c0_0 = arith.constant 0 : index
    %0 = vector.load %arg3[%c0, %c0_0] : memref<1x128xf32, #tpu.memory_space<vmem>>, vector<1x128xf32>
    %cst = arith.constant 1.000000e-01 : f32
    %cst_1 = arith.constant 0.899999976 : f32
    %1 = vector.broadcast %cst : f32 to vector<1x128xf32>
    %2 = arith.maximumf %1, %0 : vector<1x128xf32>
    %3 = vector.broadcast %cst_1 : f32 to vector<1x128xf32>
    %4 = arith.minimumf %3, %2 : vector<1x128xf32>
    %c0_2 = arith.constant 0 : index
    %c0_3 = arith.constant 0 : index
    %5 = vector.load %arg2[%c0_2, %c0_3] : memref<4x128xf32, #tpu.memory_space<vmem>>, vector<4x128xf32>
    %6 = vector.broadcast %4 : vector<1x128xf32> to vector<4x128xf32>
    %7 = arith.mulf %5, %6 : vector<4x128xf32>
    %c0_4 = arith.constant 0 : index
    %c0_5 = arith.constant 0 : index
    %8 = vector.load %arg4[%c0_4, %c0_5] : memref<4x128xf32, #tpu.memory_space<vmem>>, vector<4x128xf32>
    tpu.vector_store %arg4[%c0_4, %c0_5], %7 {strides = array<i32>} : memref<4x128xf32, #tpu.memory_space<vmem>>, vector<4x128xf32>,
    return
  }
  func.func @transform_0(%arg0: i32, %arg1: i32) -> (i32, i32) {
    %c0_i32 = arith.constant 0 : i32
    return %arg1, %arg0 : i32, i32
  }
  func.func @transform_1(%arg0: i32, %arg1: i32) -> (i32, i32) {
    %c0_i32 = arith.constant 0 : i32
    %c0_i32_0 = arith.constant 0 : i32
    return %c0_i32, %arg0 : i32, i32
  }
  func.func @transform_2(%arg0: i32, %arg1: i32) -> (i32, i32) {
    %c0_i32 = arith.constant 0 : i32
    return %arg1, %arg0 : i32, i32
  }
}

</mosaic_0001>

<llo_original>
// kernel: tpu_custom_call.1
$region0: #{tpu_custom_call.1}
  #allocation0 [shape = 'u32[]', space=smem, size = 0x4, offset = 0x4, fixed_abs, tag = 'smem constant byte address 0x4 - core index']
  #allocation1 [shape = 'u32[144,128]{1,0:T(1,128)}', space=vmem, size = 0x12000, scoped, tag = 'internal scratch']
  %s0 = inlined_call_operand.hbm [shape: f32[4,128], index: 0, kind: input, shape index: {}]
  %s1 = inlined_call_operand.vmem [shape: f32[1,128], index: 1, kind: input, shape index: {}]
  %s2 = inlined_call_operand.hbm [shape: f32[4,128], index: 2, kind: output, shape index: {}]
  %s3 = sld [smem:[#allocation0]]
  $region22: #{tpu_custom_call.1} parent=0
    _
  %s5 = ssub.s32 1, %s3
  %s6 = scalar_select 0, %s5, %s3
  $region1: #{tpu_custom_call.1} parent=0
    #allocation2 [shape = 'u8[2048]{0}', space=vmem, size = 0x800, scoped, tag = 'input window, operand 0, single buffered']
    #allocation3 [shape = 's32[1]{0}', space=sflag, size = 0x4, scoped, tag = 'scoped memory for tpu_custom_call.1']
    #allocation4 [shape = 's32[1]{0}', space=sflag, size = 0x4, scoped, tag = 'scoped memory for tpu_custom_call.1']
    #allocation5 [shape = 'u8[2048]{0}', space=vmem, size = 0x800, scoped, tag = 'output window, operand 0, single buffered']
    %7 = vsyncpa [#allocation3], 0
    %8 = vsyncpa [#allocation4], 0
    // Predicated region
    $region2: #{tpu_custom_call.1} parent=1 // pred_check
      _
    $region3: #{tpu_custom_call.1} parent=1 // pred_check_branch
      %10 = sbr.rel (0) target = $region5
    $region4: #{tpu_custom_call.1} parent=1 // pred_region
      %s12 = ssub.s32 64, 64
      %13 = vsyncadd [#allocation3], %s12
      %s15 = sshll.u32 [#allocation2], 4
      %s16 = int_to_ptr.vmem [resolvable:$true] %s15
      %18 = dma.hbm_to_vmem [thread:$0]  %s0, 64, %s16, [#allocation3]
    $region5: #{tpu_custom_call.1} parent=1 // pred_fallthru
      _
    // Predicated region
    $region6: #{tpu_custom_call.1} parent=1 // pred_check
      _
    $region7: #{tpu_custom_call.1} parent=1 // pred_check_branch
      %20 = sbr.rel (0) target = $region9
    $region8: #{tpu_custom_call.1} parent=1 // pred_region
      _
    $region9: #{tpu_custom_call.1} parent=1 // pred_fallthru
      _
    // Predicated region
    $region10: #{tpu_custom_call.1} parent=1 // pred_check
      _
    $region11: #{tpu_custom_call.1} parent=1 // pred_check_branch
      %22 = sbr.rel (0) target = $region13
    $region12: #{tpu_custom_call.1} parent=1 // pred_region
      %23 = dma.done [#allocation3], 64
    $region13: #{tpu_custom_call.1} parent=1 // pred_fallthru
      _
    %v24 = vld [vmem:[%s1] sm:$0x1]
    %v25 = vmax.f32 %v24, 0.1
    %v26 = vmin.f32 %v25, 0.9
    %v27 = vld [vmem:[#allocation2] sm:$0xf]
    %v29 = vlaneseq
    %v30 = vshrl.u32 %v29, 7
    %v31 = vsub.s32 0, %v30
    %v32 = vrot.slane %v26, %v31
    %v34 = vmul.f32 %v27, %v32
    %35 = vst [vmem:[#allocation5] sm:$0xf] %v34
    // Predicated region
    $region14: #{tpu_custom_call.1} parent=1 // pred_check
      _
    $region15: #{tpu_custom_call.1} parent=1 // pred_check_branch
      %37 = sbr.rel (0) target = $region17
    $region16: #{tpu_custom_call.1} parent=1 // pred_region
      %s39 = ssub.s32 64, 64
      %40 = vsyncadd [#allocation4], %s39
      %s42 = sshll.u32 [#allocation5], 4
      %s43 = int_to_ptr.vmem [resolvable:$true] %s42
      %45 = dma.vmem_to_hbm [thread:$0]  %s43, 64, %s2, [#allocation4]
    $region17: #{tpu_custom_call.1} parent=1 // pred_fallthru
      _
    // Predicated region
    $region18: #{tpu_custom_call.1} parent=1 // pred_check
      _
    $region19: #{tpu_custom_call.1} parent=1 // pred_check_branch
      %47 = sbr.rel (0) target = $region21
    $region20: #{tpu_custom_call.1} parent=1 // pred_region
      %48 = dma.done [#allocation4], 64
    $region21: #{tpu_custom_call.1} parent=1 // pred_fallthru
      _
    %49 = vsyncpa [#allocation3], 1
    %50 = vsyncpa [#allocation4], 1

</llo_original>
